<compile_context>
chip_gen: v6e
topology: v6e:2x2x1
jax: 0.10.0
libtpu: 0.0.40
codegen_flags: <defaults>
</compile_context>

<pallas_src>
import functools

import numpy as np
import jax
import jax.numpy as jnp
from jax.experimental import pallas as pl
from jax.experimental.pallas import tpu as pltpu  # noqa: F401  (kept for the tiled large-n path)


LANE = 128


# ----------------------------------------------------------------------------
# Fused Pallas kernel: all GraphConv layers + L2 normalize, single invocation
# ----------------------------------------------------------------------------
def gcn_fused_kernel(*refs, layer_dims, relu_flags, uses_r_adj):
    """refs = (adj, [r_adj,] x, w_packed, b_packed, out).

    w_packed: [L, max_ic, max_oc] zero-padded, b_packed: [L, max_oc] zero-padded.
    Per layer i (static (ic, oc) from layer_dims):
        x = act(A @ (x @ W_i) + b_i)   with A alternating adj / r_adj,
    re-associated to (A @ x) @ W_i when oc > ic so the n*n adjacency matmul
    contracts against the smaller channel dimension.
    Epilogue: row-wise L2 normalize (torch F.normalize, eps=1e-12).
    """
    if uses_r_adj:
        adj_ref, r_adj_ref, x_ref, w_ref, b_ref, o_ref = refs
    else:
        adj_ref, x_ref, w_ref, b_ref, o_ref = refs
        r_adj_ref = adj_ref  # never selected

    x = x_ref[...]  # f32 [n, in_c]

    graph_side = True
    for i, (ic, oc) in enumerate(layer_dims):
        # Load only this layer's adjacency / weights here (bounds live ranges;
        # nothing n*n-sized is pinned across the whole unrolled loop).
        a = (adj_ref if graph_side else r_adj_ref)[...]          # f32 [n, n]
        w = w_ref[i][:ic, :oc]                                   # f32 [ic, oc]
        b = b_ref[...][i:i + 1, :oc]                             # f32 [1, oc]

        if oc > ic:
            # (A @ X) @ W — adjacency matmul at width ic < oc.
            out = jnp.dot(
                jnp.dot(a, x, preferred_element_type=jnp.float32), w,
                preferred_element_type=jnp.float32)
        else:
            # A @ (X @ W) — adjacency matmul at width oc <= ic.
            out = jnp.dot(
                a, jnp.dot(x, w, preferred_element_type=jnp.float32),
                preferred_element_type=jnp.float32)

        out = out + b
        if relu_flags[i]:
            out = jnp.maximum(out, 0.2 * out)   # LeakyReLU(negative_slope=0.2)
        x = out
        graph_side = not graph_side

    # Fused L2 normalize.  The last layer's W/b are zero-padded to the lane
    # width, so the padded columns are exactly zero and don't perturb the norms.
    sq = jnp.sum(x * x, axis=1, keepdims=True)
    inv = jax.lax.rsqrt(jnp.maximum(sq, 1e-24))   # == 1 / max(||x||_2, 1e-12)
    o_ref[...] = (x * inv).astype(o_ref.dtype)


# ----------------------------------------------------------------------------
# Wrapper: one pallas_call for the whole forward pass
# ----------------------------------------------------------------------------
def gcn_dense_forward(x, adj, r_adj, layers, out_channels):
    n = adj.shape[0]
    in_c = x.shape[1]
    num_layers = len(layers)
    pad_out = ((out_channels + LANE - 1) // LANE) * LANE   # lane-dense output width

    # Static per-layer dims (last layer's oc padded to the lane width) + flags.
    layer_dims = []
    relu_flags = []
    for li, (w, _, relu) in enumerate(layers):
        ic, oc = w.shape
        if li == num_layers - 1:
            oc = pad_out
        layer_dims.append((int(ic), int(oc)))
        relu_flags.append(bool(relu))
    max_ic = max(ic for ic, _ in layer_dims)
    max_oc = max(oc for _, oc in layer_dims)

    # Pack all weights / biases into two zero-padded slabs (5 inputs total).
    w_packed = jnp.zeros((num_layers, max_ic, max_oc), jnp.float32)
    b_packed = jnp.zeros((num_layers, max_oc), jnp.float32)
    for li, (w, b, _) in enumerate(layers):
        ic, oc = w.shape
        w_packed = w_packed.at[li, :ic, :oc].set(w.astype(jnp.float32))
        b_packed = b_packed.at[li, :oc].set(b.astype(jnp.float32))

    # r_adj is only needed if some layer lands on the "reverse" side.
    uses_r_adj = num_layers >= 2

    inputs = [adj.astype(jnp.float32)]
    in_specs = [pl.BlockSpec((n, n), lambda: (0, 0))]
    if uses_r_adj:
        inputs.append(r_adj.astype(jnp.float32))
        in_specs.append(pl.BlockSpec((n, n), lambda: (0, 0)))
    inputs += [x.astype(jnp.float32), w_packed, b_packed]
    in_specs += [
        pl.BlockSpec((n, in_c), lambda: (0, 0)),
        pl.BlockSpec((num_layers, max_ic, max_oc), lambda: (0, 0, 0)),
        pl.BlockSpec((num_layers, max_oc), lambda: (0, 0)),
    ]

    kernel = functools.partial(
        gcn_fused_kernel,
        layer_dims=tuple(layer_dims),
        relu_flags=tuple(relu_flags),
        uses_r_adj=uses_r_adj,
    )

    # No compiler_params: total resident footprint here is ~110 KiB, far below
    # the default scoped VMEM limit on v5e/v6e/v7x, so no limit override is
    # needed (and asking for 64 MiB would be the whole physical VMEM on v7x).
    out_padded = pl.pallas_call(
        kernel,
        out_shape=jax.ShapeDtypeStruct((n, pad_out), jnp.float32),
        in_specs=in_specs,
        out_specs=pl.BlockSpec((n, pad_out), lambda: (0, 0)),
    )(*inputs)
    return out_padded[:, :out_channels]


# ----------------------------------------------------------------------------
# Pure-JAX reference (mirrors the PyTorch forward) for a correctness check
# ----------------------------------------------------------------------------
def gcn_dense_reference(x, adj, r_adj, layers):
    x = x.astype(jnp.float32)
    graph_side = True
    for (w, b, relu) in layers:
        a = adj if graph_side else r_adj
        out = a @ (x @ w) + b
        if relu:
            out = jnp.where(out >= 0, out, 0.2 * out)
        x = out
        graph_side = not graph_side
    norm = jnp.sqrt(jnp.sum(x * x, axis=1, keepdims=True))
    return x / jnp.maximum(norm, 1e-12)


# ----------------------------------------------------------------------------
# GCN_Dense module (parameter construction mirroring the PyTorch __init__)
# ----------------------------------------------------------------------------
def row_normalize(a):
    """Row-normalize a dense adjacency matrix: D^-1 A (zero-degree rows stay zero)."""
    rowsum = a.sum(axis=1, keepdims=True)
    inv = np.where(rowsum > 0, 1.0 / np.maximum(rowsum, 1e-30), 0.0)
    return (a * inv).astype(np.float32)


def xavier_uniform(key, fan_in, fan_out):
    bound = float(np.sqrt(6.0 / (fan_in + fan_out)))
    return jax.random.uniform(key, (fan_in, fan_out), dtype=jnp.float32,
                              minval=-bound, maxval=bound)


def build_gcn_dense(key, n, edges, in_channels, out_channels, hidden_layers):
    """Builds (adj, r_adj, layer param list) mirroring GCN_Dense.__init__."""
    edges = np.asarray(edges, dtype=np.int64)
    a = np.zeros((n, n), dtype=np.float32)
    a[edges[:, 0], edges[:, 1]] = 1.0
    adj = jnp.asarray(row_normalize(a))
    r_adj = jnp.asarray(row_normalize(a.T))

    hl = hidden_layers.split(',')
    if hl[-1] == 'd':
        hl = hl[:-1]

    layers = []   # list of (w, b, relu)
    last_c = in_channels
    for c in hl:
        if c[0] == 'd':
            c = c[1:]
        c = int(c)
        key, sub = jax.random.split(key)
        w = xavier_uniform(sub, last_c, c)
        b = jnp.zeros((c,), jnp.float32)
        layers.append((w, b, True))
        last_c = c
    key, sub = jax.random.split(key)
    w = xavier_uniform(sub, last_c, out_channels)
    b = jnp.zeros((out_channels,), jnp.float32)
    layers.append((w, b, False))  # last layer: no relu
    return adj, r_adj, layers


# ----------------------------------------------------------------------------
# Main
# ----------------------------------------------------------------------------
if __name__ == "__main__":
    key = jax.random.PRNGKey(0)

    n = 16                 # number of graph nodes
    in_channels = 32
    out_channels = 16
    hidden_layers = "d64,d32"

    # Deterministic synthetic edge list: a ring plus a few chords (with self-loops).
    edges = []
    for i in range(n):
        edges.append((i, i))
        edges.append((i, (i + 1) % n))
        edges.append((i, (i + 3) % n))

    adj, r_adj, layers = build_gcn_dense(
        key, n, edges, in_channels, out_channels, hidden_layers)

    key, xkey = jax.random.split(key)
    x = jax.random.normal(xkey, (n, in_channels), dtype=jnp.float32)

    out = gcn_dense_forward(x, adj, r_adj, layers, out_channels)
    out = jax.block_until_ready(out)

    assert out.shape == (n, out_channels)
    assert bool(jnp.all(jnp.isfinite(out)))

    # Rows of a normalized output should have unit L2 norm.
    norms = jnp.sqrt(jnp.sum(out * out, axis=1))
    assert bool(jnp.all(jnp.abs(norms - 1.0) < 1e-3))

    # Exact-semantics check against a pure-JAX reference of the PyTorch forward.
    ref = gcn_dense_reference(x, adj, r_adj, layers)
    assert bool(jnp.allclose(out, ref, rtol=1e-4, atol=1e-4)), \
        float(jnp.max(jnp.abs(out - ref)))

    print("KERNEL_OK")
</pallas_src>

<mosaic_0001>
module attributes {stable_mosaic.version = 11 : i64} {
  func.func @gcn_fused_kernel(%arg0: memref<16x16xf32, #tpu.memory_space<vmem>>, %arg1: memref<16x16xf32, #tpu.memory_space<vmem>>, %arg2: memref<16x32xf32, #tpu.memory_space<vmem>>, %arg3: memref<3x64x128xf32, #tpu.memory_space<vmem>>, %arg4: memref<3x128xf32, #tpu.memory_space<vmem>>, %arg5: memref<16x128xf32, #tpu.memory_space<vmem>>) attributes {dimension_semantics = [], scalar_prefetch = 0 : i64, scratch_operands = 0 : i64, tpu.core_type = #tpu.core_type<tc>} {
    %c0 = arith.constant 0 : index
    %c0_0 = arith.constant 0 : index
    %0 = vector.load %arg2[%c0, %c0_0] : memref<16x32xf32, #tpu.memory_space<vmem>>, vector<16x32xf32>
    %c0_1 = arith.constant 0 : index
    %c0_2 = arith.constant 0 : index
    %1 = vector.load %arg0[%c0_1, %c0_2] : memref<16x16xf32, #tpu.memory_space<vmem>>, vector<16x16xf32>
    %c0_3 = arith.constant 0 : index
    %c0_4 = arith.constant 0 : index
    %c0_5 = arith.constant 0 : index
    %2 = vector.load %arg3[%c0_3, %c0_4, %c0_5] : memref<3x64x128xf32, #tpu.memory_space<vmem>>, vector<1x64x128xf32>
    %3 = vector.shape_cast %2 : vector<1x64x128xf32> to vector<64x128xf32>
    %4 = vector.extract_strided_slice %3 {offsets = [0, 0], sizes = [32, 64], strides = [1, 1]} : vector<64x128xf32> to vector<32x64xf32>
    %c0_6 = arith.constant 0 : index
    %c0_7 = arith.constant 0 : index
    %5 = vector.load %arg4[%c0_6, %c0_7] : memref<3x128xf32, #tpu.memory_space<vmem>>, vector<3x128xf32>
    %6 = vector.extract_strided_slice %5 {offsets = [0, 0], sizes = [1, 64], strides = [1, 1]} : vector<3x128xf32> to vector<1x64xf32>
    %cst = arith.constant dense<0.000000e+00> : vector<16x32xf32>
    %7 = tpu.matmul %1, %0, %cst {dimension_numbers = #tpu.dot_dimension_numbers<[1], [0], [0], [1], [0, 0, 1, 1], [], []>} : vector<16x16xf32>, vector<16x32xf32>, vector<16x32xf32> -> vector<16x32xf32>
    %cst_8 = arith.constant dense<0.000000e+00> : vector<16x64xf32>
    %8 = tpu.matmul %7, %4, %cst_8 {dimension_numbers = #tpu.dot_dimension_numbers<[1], [0], [0], [1], [0, 0, 1, 1], [], []>} : vector<16x32xf32>, vector<32x64xf32>, vector<16x64xf32> -> vector<16x64xf32>
    %9 = vector.broadcast %6 : vector<1x64xf32> to vector<16x64xf32>
    %10 = arith.addf %8, %9 : vector<16x64xf32>
    %cst_9 = arith.constant 2.000000e-01 : f32
    %11 = vector.broadcast %cst_9 : f32 to vector<16x64xf32>
    %12 = arith.mulf %11, %10 : vector<16x64xf32>
    %13 = arith.maximumf %10, %12 : vector<16x64xf32>
    %c0_10 = arith.constant 0 : index
    %c0_11 = arith.constant 0 : index
    %14 = vector.load %arg1[%c0_10, %c0_11] : memref<16x16xf32, #tpu.memory_space<vmem>>, vector<16x16xf32>
    %c1 = arith.constant 1 : index
    %c0_12 = arith.constant 0 : index
    %c0_13 = arith.constant 0 : index
    %15 = vector.load %arg3[%c1, %c0_12, %c0_13] : memref<3x64x128xf32, #tpu.memory_space<vmem>>, vector<1x64x128xf32>
    %16 = vector.shape_cast %15 : vector<1x64x128xf32> to vector<64x128xf32>
    %17 = vector.extract_strided_slice %16 {offsets = [0, 0], sizes = [64, 32], strides = [1, 1]} : vector<64x128xf32> to vector<64x32xf32>
    %c0_14 = arith.constant 0 : index
    %c0_15 = arith.constant 0 : index
    %18 = vector.load %arg4[%c0_14, %c0_15] : memref<3x128xf32, #tpu.memory_space<vmem>>, vector<3x128xf32>
    %19 = vector.extract_strided_slice %18 {offsets = [1, 0], sizes = [1, 32], strides = [1, 1]} : vector<3x128xf32> to vector<1x32xf32>
    %cst_16 = arith.constant dense<0.000000e+00> : vector<16x32xf32>
    %20 = tpu.matmul %13, %17, %cst_16 {dimension_numbers = #tpu.dot_dimension_numbers<[1], [0], [0], [1], [0, 0, 1, 1], [], []>} : vector<16x64xf32>, vector<64x32xf32>, vector<16x32xf32> -> vector<16x32xf32>
    %cst_17 = arith.constant dense<0.000000e+00> : vector<16x32xf32>
    %21 = tpu.matmul %14, %20, %cst_17 {dimension_numbers = #tpu.dot_dimension_numbers<[1], [0], [0], [1], [0, 0, 1, 1], [], []>} : vector<16x16xf32>, vector<16x32xf32>, vector<16x32xf32> -> vector<16x32xf32>
    %22 = vector.broadcast %19 : vector<1x32xf32> to vector<16x32xf32>
    %23 = arith.addf %21, %22 : vector<16x32xf32>
    %cst_18 = arith.constant 2.000000e-01 : f32
    %24 = vector.broadcast %cst_18 : f32 to vector<16x32xf32>
    %25 = arith.mulf %24, %23 : vector<16x32xf32>
    %26 = arith.maximumf %23, %25 : vector<16x32xf32>
    %c0_19 = arith.constant 0 : index
    %c0_20 = arith.constant 0 : index
    %27 = vector.load %arg0[%c0_19, %c0_20] : memref<16x16xf32, #tpu.memory_space<vmem>>, vector<16x16xf32>
    %c2 = arith.constant 2 : index
    %c0_21 = arith.constant 0 : index
    %c0_22 = arith.constant 0 : index
    %28 = vector.load %arg3[%c2, %c0_21, %c0_22] : memref<3x64x128xf32, #tpu.memory_space<vmem>>, vector<1x64x128xf32>
    %29 = vector.shape_cast %28 : vector<1x64x128xf32> to vector<64x128xf32>
    %30 = vector.extract_strided_slice %29 {offsets = [0, 0], sizes = [32, 128], strides = [1, 1]} : vector<64x128xf32> to vector<32x128xf32>
    %c0_23 = arith.constant 0 : index
    %c0_24 = arith.constant 0 : index
    %31 = vector.load %arg4[%c0_23, %c0_24] : memref<3x128xf32, #tpu.memory_space<vmem>>, vector<3x128xf32>
    %32 = vector.extract_strided_slice %31 {offsets = [2, 0], sizes = [1, 128], strides = [1, 1]} : vector<3x128xf32> to vector<1x128xf32>
    %cst_25 = arith.constant dense<0.000000e+00> : vector<16x32xf32>
    %33 = tpu.matmul %27, %26, %cst_25 {dimension_numbers = #tpu.dot_dimension_numbers<[1], [0], [0], [1], [0, 0, 1, 1], [], []>} : vector<16x16xf32>, vector<16x32xf32>, vector<16x32xf32> -> vector<16x32xf32>
    %cst_26 = arith.constant dense<0.000000e+00> : vector<16x128xf32>
    %34 = tpu.matmul %33, %30, %cst_26 {dimension_numbers = #tpu.dot_dimension_numbers<[1], [0], [0], [1], [0, 0, 1, 1], [], []>} : vector<16x32xf32>, vector<32x128xf32>, vector<16x128xf32> -> vector<16x128xf32>
    %35 = vector.broadcast %32 : vector<1x128xf32> to vector<16x128xf32>
    %36 = arith.addf %34, %35 : vector<16x128xf32>
    %37 = arith.mulf %36, %36 : vector<16x128xf32>
    %cst_27 = arith.constant dense<0.000000e+00> : vector<16xf32>
    %38 = vector.multi_reduction <add>, %37, %cst_27 [1] : vector<16x128xf32> to vector<16xf32>
    %39 = vector.shape_cast %38 : vector<16xf32> to vector<16x1xf32>
    %cst_28 = arith.constant 1.000000e-24 : f32
    %40 = vector.broadcast %cst_28 : f32 to vector<16x1xf32>
    %41 = arith.maximumf %39, %40 : vector<16x1xf32>
    %42 = math.rsqrt %41 : vector<16x1xf32>
    %43 = vector.broadcast %42 : vector<16x1xf32> to vector<16x128xf32>
    %44 = arith.mulf %36, %43 : vector<16x128xf32>
    %c0_29 = arith.constant 0 : index
    %c0_30 = arith.constant 0 : index
    %45 = vector.load %arg5[%c0_29, %c0_30] : memref<16x128xf32, #tpu.memory_space<vmem>>, vector<16x128xf32>
    tpu.vector_store %arg5[%c0_29, %c0_30], %44 {strides = array<i32>} : memref<16x128xf32, #tpu.memory_space<vmem>>, vector<16x128xf32>,
    return
  }
}

</mosaic_0001>

<llo_original>
// kernel: tpu_custom_call.1
$region0: #{tpu_custom_call.1}
  #allocation0 [shape = 'u32[]', space=smem, size = 0x4, offset = 0x4, fixed_abs, tag = 'smem constant byte address 0x4 - core index']
  #allocation1 [shape = 'u32[144,128]{1,0:T(1,128)}', space=vmem, size = 0x12000, scoped, tag = 'internal scratch']
  %s0 = inlined_call_operand.hbm [shape: f32[16,16], index: 0, kind: input, shape index: {}]
  %s1 = inlined_call_operand.hbm [shape: f32[16,16], index: 1, kind: input, shape index: {}]
  %s2 = inlined_call_operand.hbm [shape: f32[16,32], index: 2, kind: input, shape index: {}]
  %s3 = inlined_call_operand.hbm [shape: f32[3,64,128], index: 3, kind: input, shape index: {}]
  %s4 = inlined_call_operand.vmem [shape: f32[3,128], index: 4, kind: input, shape index: {}]
  %s5 = inlined_call_operand.hbm [shape: f32[16,128], index: 5, kind: output, shape index: {}]
  %s6 = sld [smem:[#allocation0]]
  $region46: #{tpu_custom_call.1} parent=0
    _
  %s8 = ssub.s32 1, %s6
  %s9 = scalar_select 0, %s8, %s6
  $region1: #{tpu_custom_call.1} parent=0
    #allocation2 [shape = 'u8[8192]{0}', space=vmem, size = 0x2000, scoped, tag = 'input window, operand 0, single buffered']
    #allocation3 [shape = 's32[1]{0}', space=sflag, size = 0x4, scoped, tag = 'scoped memory for tpu_custom_call.1']
    #allocation4 [shape = 's32[1]{0}', space=sflag, size = 0x4, scoped, tag = 'scoped memory for tpu_custom_call.1']
    #allocation5 [shape = 'u8[8192]{0}', space=vmem, size = 0x2000, scoped, tag = 'input window, operand 1, single buffered']
    #allocation6 [shape = 's32[1]{0}', space=sflag, size = 0x4, scoped, tag = 'scoped memory for tpu_custom_call.1']
    #allocation7 [shape = 'u8[8192]{0}', space=vmem, size = 0x2000, scoped, tag = 'input window, operand 2, single buffered']
    #allocation8 [shape = 'u8[98304]{0}', space=vmem, size = 0x18000, scoped, tag = 'input window, operand 3, single buffered']
    #allocation9 [shape = 's32[1]{0}', space=sflag, size = 0x4, scoped, tag = 'scoped memory for tpu_custom_call.1']
    #allocation10 [shape = 'u8[8192]{0}', space=vmem, size = 0x2000, scoped, tag = 'output window, operand 0, single buffered']
    %10 = vsyncpa [#allocation3], 0
    %11 = vsyncpa [#allocation6], 0
    %12 = vsyncpa [#allocation9], 0
    %13 = vsyncpa [#allocation4], 0
    // Predicated region
    $region2: #{tpu_custom_call.1} parent=1 // pred_check
      _
    $region3: #{tpu_custom_call.1} parent=1 // pred_check_branch
      %15 = sbr.rel (0) target = $region5
    $region4: #{tpu_custom_call.1} parent=1 // pred_region
      %s17 = ssub.s32 256, 256
      %18 = vsyncadd [#allocation3], %s17
      %s19 = sshll.u32 [#allocation2], 4
      %s20 = int_to_ptr.vmem [resolvable:$true] %s19
      %25 = dma.hbm_to_vmem [thread:$0]  %s0, 256, %s20, [#allocation3], 128, 128, 8
    $region5: #{tpu_custom_call.1} parent=1 // pred_fallthru
      _
    // Predicated region
    $region6: #{tpu_custom_call.1} parent=1 // pred_check
      _
    $region7: #{tpu_custom_call.1} parent=1 // pred_check_branch
      %27 = sbr.rel (0) target = $region9
    $region8: #{tpu_custom_call.1} parent=1 // pred_region
      %s29 = ssub.s32 256, 256
      %30 = vsyncadd [#allocation6], %s29
      %s31 = sshll.u32 [#allocation5], 4
      %s32 = int_to_ptr.vmem [resolvable:$true] %s31
      %37 = dma.hbm_to_vmem [thread:$0]  %s1, 256, %s32, [#allocation6], 128, 128, 8
    $region9: #{tpu_custom_call.1} parent=1 // pred_fallthru
      _
    // Predicated region
    $region10: #{tpu_custom_call.1} parent=1 // pred_check
      _
    $region11: #{tpu_custom_call.1} parent=1 // pred_check_branch
      %39 = sbr.rel (0) target = $region13
    $region12: #{tpu_custom_call.1} parent=1 // pred_region
      %s41 = ssub.s32 256, 256
      %42 = vsyncadd [#allocation6], %s41
      %s43 = sshll.u32 [#allocation7], 4
      %s44 = int_to_ptr.vmem [resolvable:$true] %s43
      %49 = dma.hbm_to_vmem [thread:$0]  %s2, 256, %s44, [#allocation6], 128, 128, 8
    $region13: #{tpu_custom_call.1} parent=1 // pred_fallthru
      _
    // Predicated region
    $region14: #{tpu_custom_call.1} parent=1 // pred_check
      _
    $region15: #{tpu_custom_call.1} parent=1 // pred_check_branch
      %51 = sbr.rel (0) target = $region17
    $region16: #{tpu_custom_call.1} parent=1 // pred_region
      %s53 = ssub.s32 3072, 3072
      %54 = vsyncadd [#allocation9], %s53
      %s55 = sshll.u32 [#allocation8], 4
      %s56 = int_to_ptr.vmem [resolvable:$true] %s55
      %61 = dma.hbm_to_vmem [thread:$0]  %s3, 3072, %s56, [#allocation9], 128, 128, 8
    $region17: #{tpu_custom_call.1} parent=1 // pred_fallthru
      _
    // Predicated region
    $region18: #{tpu_custom_call.1} parent=1 // pred_check
      _
    $region19: #{tpu_custom_call.1} parent=1 // pred_check_branch
      %63 = sbr.rel (0) target = $region21
    $region20: #{tpu_custom_call.1} parent=1 // pred_region
      _
    $region21: #{tpu_custom_call.1} parent=1 // pred_fallthru
      _
    // Predicated region
    $region22: #{tpu_custom_call.1} parent=1 // pred_check
      _
    $region23: #{tpu_custom_call.1} parent=1 // pred_check_branch
      %65 = sbr.rel (0) target = $region25
    $region24: #{tpu_custom_call.1} parent=1 // pred_region
      %66 = dma.done [#allocation3], 256
    $region25: #{tpu_custom_call.1} parent=1 // pred_fallthru
      _
    // Predicated region
    $region26: #{tpu_custom_call.1} parent=1 // pred_check
      _
    $region27: #{tpu_custom_call.1} parent=1 // pred_check_branch
      %68 = sbr.rel (0) target = $region29
    $region28: #{tpu_custom_call.1} parent=1 // pred_region
      %69 = dma.done [#allocation6], 256
    $region29: #{tpu_custom_call.1} parent=1 // pred_fallthru
      _
    // Predicated region
    $region30: #{tpu_custom_call.1} parent=1 // pred_check
      _
    $region31: #{tpu_custom_call.1} parent=1 // pred_check_branch
      %71 = sbr.rel (0) target = $region33
    $region32: #{tpu_custom_call.1} parent=1 // pred_region
      %72 = dma.done [#allocation6], 256
    $region33: #{tpu_custom_call.1} parent=1 // pred_fallthru
      _
    // Predicated region
    $region34: #{tpu_custom_call.1} parent=1 // pred_check
      _
    $region35: #{tpu_custom_call.1} parent=1 // pred_check_branch
      %74 = sbr.rel (0) target = $region37
    $region36: #{tpu_custom_call.1} parent=1 // pred_region
      %75 = dma.done [#allocation9], 3072
    $region37: #{tpu_custom_call.1} parent=1 // pred_fallthru
      _
    %v76 = vld [vmem:[#allocation7] sm:$0xff]
    %v77 = vld [vmem:[#allocation7 + $0x8] sm:$0xff]
    %v78 = vld [vmem:[#allocation2] sm:$0xff]
    %v79 = vld [vmem:[#allocation2 + $0x8] sm:$0xff]
    %v80 = vld [vmem:[#allocation8] sm:$0xff]
    %v81 = vld [vmem:[#allocation8 + $0x8] sm:$0xff]
    %v82 = vld [vmem:[#allocation8 + $0x10] sm:$0xff]
    %v83 = vld [vmem:[#allocation8 + $0x18] sm:$0xff]
    %v84 = vld [vmem:[%s4] sm:$0x7]
    %vm85 = vcmask 130048
    %v87 = vsel %vm85, %v78, 0
    %v90 = vsel %vm85, %v79, 0
    %92 = vmatprep.subr.mxu0 0.0
    %93 = vmatpush1.msra.mxu0 0.0
    %94 = vmatprep.subr.mxu0 0.0
    %95 = vmatpush1.msra.mxu0 0.0
    %96 = vmatprep.subr.mxu0 0.0
    %97 = vmatpush1.msra.mxu0 0.0
    %98 = vmatprep.subr.mxu0 0.0
    %99 = vmatpush1.msra.mxu0 0.0
    %100 = vmatprep.subr.mxu0 0.0
    %101 = vmatpush1.msra.mxu0 0.0
    %102 = vmatprep.subr.mxu0 0.0
    %103 = vmatpush1.msra.mxu0 0.0
    %104 = vmatprep.subr.mxu0 0.0
    %105 = vmatpush1.msra.mxu0 0.0
    %106 = vmatprep.subr.mxu0 0.0
    %107 = vmatpush1.msra.mxu0 0.0
    %108 = vmatprep.subr.mxu0 0.0
    %109 = vmatpush1.msra.mxu0 0.0
    %110 = vmatprep.subr.mxu0 0.0
    %111 = vmatpush1.msra.mxu0 0.0
    %112 = vmatprep.subr.mxu0 0.0
    %113 = vmatpush1.msra.mxu0 0.0
    %114 = vmatprep.subr.mxu0 0.0
    %115 = vmatpush1.msra.mxu0 0.0
    %116 = vmatprep.subr.mxu0 0.0
    %117 = vmatpush1.msra.mxu0 0.0
    %118 = vmatprep.subr.mxu0 0.0
    %119 = vmatpush1.msra.mxu0 0.0
    %120 = vmatprep.subr.mxu0 0.0
    %121 = vmatpush1.msra.mxu0 %v77
    %122 = vmatprep.subr.mxu0 0.0
    %123 = vmatpush1.msra.mxu0 %v76
    %124 = vmatprep.subr.mxu0 0.0
    %125 = vmatpush2.msra.mxu0 0.0
    %126 = vmatprep.subr.mxu0 0.0
    %127 = vmatpush2.msra.mxu0 0.0
    %128 = vmatprep.subr.mxu0 0.0
    %129 = vmatpush2.msra.mxu0 0.0
    %130 = vmatprep.subr.mxu0 0.0
    %131 = vmatpush2.msra.mxu0 0.0
    %132 = vmatprep.subr.mxu0 0.0
    %133 = vmatpush2.msra.mxu0 0.0
    %134 = vmatprep.subr.mxu0 0.0
    %135 = vmatpush2.msra.mxu0 0.0
    %136 = vmatprep.subr.mxu0 0.0
    %137 = vmatpush2.msra.mxu0 0.0
    %138 = vmatprep.subr.mxu0 0.0
    %139 = vmatpush2.msra.mxu0 0.0
    %140 = vmatprep.subr.mxu0 0.0
    %141 = vmatpush2.msra.mxu0 0.0
    %142 = vmatprep.subr.mxu0 0.0
    %143 = vmatpush2.msra.mxu0 0.0
    %144 = vmatprep.subr.mxu0 0.0
    %145 = vmatpush2.msra.mxu0 0.0
    %146 = vmatprep.subr.mxu0 0.0
    %147 = vmatpush2.msra.mxu0 0.0
    %148 = vmatprep.subr.mxu0 0.0
    %149 = vmatpush2.msra.mxu0 0.0
    %150 = vmatprep.subr.mxu0 0.0
    %151 = vmatpush2.msra.mxu0 0.0
    %152 = vmatprep.subr.mxu0 0.0
    %153 = vmatpush2.msra.mxu0 0.0
    %154 = vmatprep.subr.mxu0 0.0
    %155 = vmatpush2.msra.mxu0 0.0
    %156 = vmatprep.mubr.f32.mxu0 0.0
    %157 = vmatmul.mubr.f32.gmra.mxu0 %v87
    %v158 = vpop.f32.mrf.mxu0
    %v159 = vadd.f32 0.0, %v158
    %v160 = vpop.f32.mrf.mxu0
    %161 = vmatprep.mubr.f32.mxu0 0.0
    %162 = vmatmul.mubr.f32.gmra.mxu0 %v90
    %v163 = vpop.f32.mrf.mxu0
    %v164 = vadd.f32 0.0, %v163
    %v165 = vpop.f32.mrf.mxu0
    %166 = vdwg.mxu0
    %v167 = vlaneseq
    %v168 = vshrl.u32 %v167, 7
    %v169 = vsub.s32 0, %v168
    %v170 = vrot.slane %v84, %v169
    %vm171 = vcmask 261120
    %v173 = vsel %vm171, %v159, 0
    %v176 = vsel %vm171, %v164, 0
    %178 = vmatprep.subr.mxu0 0.0
    %179 = vmatpush1.msra.mxu0 0.0
    %180 = vmatprep.subr.mxu0 0.0
    %181 = vmatpush1.msra.mxu0 0.0
    %182 = vmatprep.subr.mxu0 0.0
    %183 = vmatpush1.msra.mxu0 0.0
    %184 = vmatprep.subr.mxu0 0.0
    %185 = vmatpush1.msra.mxu0 0.0
    %186 = vmatprep.subr.mxu0 0.0
    %187 = vmatpush1.msra.mxu0 0.0
    %188 = vmatprep.subr.mxu0 0.0
    %189 = vmatpush1.msra.mxu0 0.0
    %190 = vmatprep.subr.mxu0 0.0
    %191 = vmatpush1.msra.mxu0 0.0
    %192 = vmatprep.subr.mxu0 0.0
    %193 = vmatpush1.msra.mxu0 0.0
    %194 = vmatprep.subr.mxu0 0.0
    %195 = vmatpush1.msra.mxu0 0.0
    %196 = vmatprep.subr.mxu0 0.0
    %197 = vmatpush1.msra.mxu0 0.0
    %198 = vmatprep.subr.mxu0 0.0
    %199 = vmatpush1.msra.mxu0 0.0
    %200 = vmatprep.subr.mxu0 0.0
    %201 = vmatpush1.msra.mxu0 0.0
    %202 = vmatprep.subr.mxu0 0.0
    %203 = vmatpush1.msra.mxu0 %v83
    %204 = vmatprep.subr.mxu0 0.0
    %205 = vmatpush1.msra.mxu0 %v82
    %206 = vmatprep.subr.mxu0 0.0
    %207 = vmatpush1.msra.mxu0 %v81
    %208 = vmatprep.subr.mxu0 0.0
    %209 = vmatpush1.msra.mxu0 %v80
    %210 = vmatprep.subr.mxu0 0.0
    %211 = vmatpush2.msra.mxu0 0.0
    %212 = vmatprep.subr.mxu0 0.0
    %213 = vmatpush2.msra.mxu0 0.0
    %214 = vmatprep.subr.mxu0 0.0
    %215 = vmatpush2.msra.mxu0 0.0
    %216 = vmatprep.subr.mxu0 0.0
    %217 = vmatpush2.msra.mxu0 0.0
    %218 = vmatprep.subr.mxu0 0.0
    %219 = vmatpush2.msra.mxu0 0.0
    %220 = vmatprep.subr.mxu0 0.0
    %221 = vmatpush2.msra.mxu0 0.0
    %222 = vmatprep.subr.mxu0 0.0
    %223 = vmatpush2.msra.mxu0 0.0
    %224 = vmatprep.subr.mxu0 0.0
    %225 = vmatpush2.msra.mxu0 0.0
    %226 = vmatprep.subr.mxu0 0.0
    %227 = vmatpush2.msra.mxu0 0.0
    %228 = vmatprep.subr.mxu0 0.0
    %229 = vmatpush2.msra.mxu0 0.0
    %230 = vmatprep.subr.mxu0 0.0
    %231 = vmatpush2.msra.mxu0 0.0
    %232 = vmatprep.subr.mxu0 0.0
    %233 = vmatpush2.msra.mxu0 0.0
    %234 = vmatprep.subr.mxu0 0.0
    %235 = vmatpush2.msra.mxu0 0.0
    %236 = vmatprep.subr.mxu0 0.0
    %237 = vmatpush2.msra.mxu0 0.0
    %238 = vmatprep.subr.mxu0 0.0
    %239 = vmatpush2.msra.mxu0 0.0
    %240 = vmatprep.subr.mxu0 0.0
    %241 = vmatpush2.msra.mxu0 0.0
    %242 = vmatprep.mubr.f32.mxu0 0.0
    %243 = vmatmul.mubr.f32.gmra.mxu0 %v173
    %v244 = vpop.f32.mrf.mxu0
    %v245 = vadd.f32 %v170, %v244
    %v246 = vpop.f32.mrf.mxu0
    %247 = vmatprep.mubr.f32.mxu0 0.0
    %248 = vmatmul.mubr.f32.gmra.mxu0 %v176
    %v249 = vpop.f32.mrf.mxu0
    %v250 = vadd.f32 %v170, %v249
    %v251 = vpop.f32.mrf.mxu0
    %252 = vdwg.mxu0
    %v253 = vmul.f32 %v245, 0.2
    %v254 = vmul.f32 %v250, 0.2
    %v255 = vmax.f32 %v245, %v253
    %v256 = vmax.f32 %v250, %v254
    %v257 = vld [vmem:[#allocation5] sm:$0xff]
    %v258 = vld [vmem:[#allocation5 + $0x8] sm:$0xff]
    %s259 = scalar_lea.vmem [#allocation8], 64
    %v260 = vld [vmem:[%s259] sm:$0xff]
    %v261 = vld [vmem:[%s259 + $0x8] sm:$0xff]
    %v262 = vld [vmem:[%s259 + $0x10] sm:$0xff]
    %v263 = vld [vmem:[%s259 + $0x18] sm:$0xff]
    %v264 = vld [vmem:[%s259 + $0x20] sm:$0xff]
    %v265 = vld [vmem:[%s259 + $0x28] sm:$0xff]
    %v266 = vld [vmem:[%s259 + $0x30] sm:$0xff]
    %v267 = vld [vmem:[%s259 + $0x38] sm:$0xff]
    %vm268 = vcmask 523264
    %v270 = vsel %vm268, %v255, 0
    %v273 = vsel %vm268, %v256, 0
    %275 = vmatprep.subr.mxu0 0.0
    %276 = vmatpush1.msra.mxu0 0.0
    %277 = vmatprep.subr.mxu0 0.0
    %278 = vmatpush1.msra.mxu0 0.0
    %279 = vmatprep.subr.mxu0 0.0
    %280 = vmatpush1.msra.mxu0 0.0
    %281 = vmatprep.subr.mxu0 0.0
    %282 = vmatpush1.msra.mxu0 0.0
    %283 = vmatprep.subr.mxu0 0.0
    %284 = vmatpush1.msra.mxu0 0.0
    %285 = vmatprep.subr.mxu0 0.0
    %286 = vmatpush1.msra.mxu0 0.0
    %287 = vmatprep.subr.mxu0 0.0
    %288 = vmatpush1.msra.mxu0 0.0
    %289 = vmatprep.subr.mxu0 0.0
    %290 = vmatpush1.msra.mxu0 0.0
    %291 = vmatprep.subr.mxu0 0.0
    %292 = vmatpush1.msra.mxu0 %v267
    %293 = vmatprep.subr.mxu0 0.0
    %294 = vmatpush1.msra.mxu0 %v266
    %295 = vmatprep.subr.mxu0 0.0
    %296 = vmatpush1.msra.mxu0 %v265
    %297 = vmatprep.subr.mxu0 0.0
    %298 = vmatpush1.msra.mxu0 %v264
    %299 = vmatprep.subr.mxu0 0.0
    %300 = vmatpush1.msra.mxu0 %v263
    %301 = vmatprep.subr.mxu0 0.0
    %302 = vmatpush1.msra.mxu0 %v262
    %303 = vmatprep.subr.mxu0 0.0
    %304 = vmatpush1.msra.mxu0 %v261
    %305 = vmatprep.subr.mxu0 0.0
    %306 = vmatpush1.msra.mxu0 %v260
    %307 = vmatprep.subr.mxu0 0.0
    %308 = vmatpush2.msra.mxu0 0.0
    %309 = vmatprep.subr.mxu0 0.0
    %310 = vmatpush2.msra.mxu0 0.0
    %311 = vmatprep.subr.mxu0 0.0
    %312 = vmatpush2.msra.mxu0 0.0
    %313 = vmatprep.subr.mxu0 0.0
    %314 = vmatpush2.msra.mxu0 0.0
    %315 = vmatprep.subr.mxu0 0.0
    %316 = vmatpush2.msra.mxu0 0.0
    %317 = vmatprep.subr.mxu0 0.0
    %318 = vmatpush2.msra.mxu0 0.0
    %319 = vmatprep.subr.mxu0 0.0
    %320 = vmatpush2.msra.mxu0 0.0
    %321 = vmatprep.subr.mxu0 0.0
    %322 = vmatpush2.msra.mxu0 0.0
    %323 = vmatprep.subr.mxu0 0.0
    %324 = vmatpush2.msra.mxu0 0.0
    %325 = vmatprep.subr.mxu0 0.0
    %326 = vmatpush2.msra.mxu0 0.0
    %327 = vmatprep.subr.mxu0 0.0
    %328 = vmatpush2.msra.mxu0 0.0
    %329 = vmatprep.subr.mxu0 0.0
    %330 = vmatpush2.msra.mxu0 0.0
    %331 = vmatprep.subr.mxu0 0.0
    %332 = vmatpush2.msra.mxu0 0.0
    %333 = vmatprep.subr.mxu0 0.0
    %334 = vmatpush2.msra.mxu0 0.0
    %335 = vmatprep.subr.mxu0 0.0
    %336 = vmatpush2.msra.mxu0 0.0
    %337 = vmatprep.subr.mxu0 0.0
    %338 = vmatpush2.msra.mxu0 0.0
    %339 = vmatprep.mubr.f32.mxu0 0.0
    %340 = vmatmul.mubr.f32.gmra.mxu0 %v270
    %v341 = vpop.f32.mrf.mxu0
    %v342 = vadd.f32 0.0, %v341
    %v343 = vpop.f32.mrf.mxu0
    %344 = vmatprep.mubr.f32.mxu0 0.0
    %345 = vmatmul.mubr.f32.gmra.mxu0 %v273
    %v346 = vpop.f32.mrf.mxu0
    %v347 = vadd.f32 0.0, %v346
    %v348 = vpop.f32.mrf.mxu0
    %349 = vdwg.mxu0
    %v350 = vlaneseq
    %v351 = vshrl.u32 %v350, 7
    %v352 = vsub.s32 1, %v351
    %v353 = vrot.slane %v84, %v352
    %v355 = vsel %vm85, %v257, 0
    %v358 = vsel %vm85, %v258, 0
    %360 = vmatprep.subr.mxu0 0.0
    %361 = vmatpush1.msra.mxu0 0.0
    %362 = vmatprep.subr.mxu0 0.0
    %363 = vmatpush1.msra.mxu0 0.0
    %364 = vmatprep.subr.mxu0 0.0
    %365 = vmatpush1.msra.mxu0 0.0
    %366 = vmatprep.subr.mxu0 0.0
    %367 = vmatpush1.msra.mxu0 0.0
    %368 = vmatprep.subr.mxu0 0.0
    %369 = vmatpush1.msra.mxu0 0.0
    %370 = vmatprep.subr.mxu0 0.0
    %371 = vmatpush1.msra.mxu0 0.0
    %372 = vmatprep.subr.mxu0 0.0
    %373 = vmatpush1.msra.mxu0 0.0
    %374 = vmatprep.subr.mxu0 0.0
    %375 = vmatpush1.msra.mxu0 0.0
    %376 = vmatprep.subr.mxu0 0.0
    %377 = vmatpush1.msra.mxu0 0.0
    %378 = vmatprep.subr.mxu0 0.0
    %379 = vmatpush1.msra.mxu0 0.0
    %380 = vmatprep.subr.mxu0 0.0
    %381 = vmatpush1.msra.mxu0 0.0
    %382 = vmatprep.subr.mxu0 0.0
    %383 = vmatpush1.msra.mxu0 0.0
    %384 = vmatprep.subr.mxu0 0.0
    %385 = vmatpush1.msra.mxu0 0.0
    %386 = vmatprep.subr.mxu0 0.0
    %387 = vmatpush1.msra.mxu0 0.0
    %388 = vmatprep.subr.mxu0 0.0
    %389 = vmatpush1.msra.mxu0 %v347
    %390 = vmatprep.subr.mxu0 0.0
    %391 = vmatpush1.msra.mxu0 %v342
    %392 = vmatprep.subr.mxu0 0.0
    %393 = vmatpush2.msra.mxu0 0.0
    %394 = vmatprep.subr.mxu0 0.0
    %395 = vmatpush2.msra.mxu0 0.0
    %396 = vmatprep.subr.mxu0 0.0
    %397 = vmatpush2.msra.mxu0 0.0
    %398 = vmatprep.subr.mxu0 0.0
    %399 = vmatpush2.msra.mxu0 0.0
    %400 = vmatprep.subr.mxu0 0.0
    %401 = vmatpush2.msra.mxu0 0.0
    %402 = vmatprep.subr.mxu0 0.0
    %403 = vmatpush2.msra.mxu0 0.0
    %404 = vmatprep.subr.mxu0 0.0
    %405 = vmatpush2.msra.mxu0 0.0
    %406 = vmatprep.subr.mxu0 0.0
    %407 = vmatpush2.msra.mxu0 0.0
    %408 = vmatprep.subr.mxu0 0.0
    %409 = vmatpush2.msra.mxu0 0.0
    %410 = vmatprep.subr.mxu0 0.0
    %411 = vmatpush2.msra.mxu0 0.0
    %412 = vmatprep.subr.mxu0 0.0
    %413 = vmatpush2.msra.mxu0 0.0
    %414 = vmatprep.subr.mxu0 0.0
    %415 = vmatpush2.msra.mxu0 0.0
    %416 = vmatprep.subr.mxu0 0.0
    %417 = vmatpush2.msra.mxu0 0.0
    %418 = vmatprep.subr.mxu0 0.0
    %419 = vmatpush2.msra.mxu0 0.0
    %420 = vmatprep.subr.mxu0 0.0
    %421 = vmatpush2.msra.mxu0 0.0
    %422 = vmatprep.subr.mxu0 0.0
    %423 = vmatpush2.msra.mxu0 0.0
    %424 = vmatprep.mubr.f32.mxu0 0.0
    %425 = vmatmul.mubr.f32.gmra.mxu0 %v355
    %v426 = vpop.f32.mrf.mxu0
    %v427 = vadd.f32 %v353, %v426
    %v428 = vpop.f32.mrf.mxu0
    %429 = vmatprep.mubr.f32.mxu0 0.0
    %430 = vmatmul.mubr.f32.gmra.mxu0 %v358
    %v431 = vpop.f32.mrf.mxu0
    %v432 = vadd.f32 %v353, %v431
    %v433 = vpop.f32.mrf.mxu0
    %434 = vdwg.mxu0
    %v435 = vmul.f32 %v427, 0.2
    %v436 = vmul.f32 %v432, 0.2
    %v437 = vmax.f32 %v427, %v435
    %v438 = vmax.f32 %v432, %v436
    %s439 = scalar_lea.vmem [#allocation8], 128
    %v440 = vld [vmem:[%s439] sm:$0xff]
    %v441 = vld [vmem:[%s439 + $0x8] sm:$0xff]
    %v442 = vld [vmem:[%s439 + $0x10] sm:$0xff]
    %v443 = vld [vmem:[%s439 + $0x18] sm:$0xff]
    %444 = vmatprep.subr.mxu0 0.0
    %445 = vmatpush1.msra.mxu0 0.0
    %446 = vmatprep.subr.mxu0 0.0
    %447 = vmatpush1.msra.mxu0 0.0
    %448 = vmatprep.subr.mxu0 0.0
    %449 = vmatpush1.msra.mxu0 0.0
    %450 = vmatprep.subr.mxu0 0.0
    %451 = vmatpush1.msra.mxu0 0.0
    %452 = vmatprep.subr.mxu0 0.0
    %453 = vmatpush1.msra.mxu0 0.0
    %454 = vmatprep.subr.mxu0 0.0
    %455 = vmatpush1.msra.mxu0 0.0
    %456 = vmatprep.subr.mxu0 0.0
    %457 = vmatpush1.msra.mxu0 0.0
    %458 = vmatprep.subr.mxu0 0.0
    %459 = vmatpush1.msra.mxu0 0.0
    %460 = vmatprep.subr.mxu0 0.0
    %461 = vmatpush1.msra.mxu0 0.0
    %462 = vmatprep.subr.mxu0 0.0
    %463 = vmatpush1.msra.mxu0 0.0
    %464 = vmatprep.subr.mxu0 0.0
    %465 = vmatpush1.msra.mxu0 0.0
    %466 = vmatprep.subr.mxu0 0.0
    %467 = vmatpush1.msra.mxu0 0.0
    %468 = vmatprep.subr.mxu0 0.0
    %469 = vmatpush1.msra.mxu0 0.0
    %470 = vmatprep.subr.mxu0 0.0
    %471 = vmatpush1.msra.mxu0 0.0
    %472 = vmatprep.subr.mxu0 0.0
    %473 = vmatpush1.msra.mxu0 %v438
    %474 = vmatprep.subr.mxu0 0.0
    %475 = vmatpush1.msra.mxu0 %v437
    %476 = vmatprep.subr.mxu0 0.0
    %477 = vmatpush2.msra.mxu0 0.0
    %478 = vmatprep.subr.mxu0 0.0
    %479 = vmatpush2.msra.mxu0 0.0
    %480 = vmatprep.subr.mxu0 0.0
    %481 = vmatpush2.msra.mxu0 0.0
    %482 = vmatprep.subr.mxu0 0.0
    %483 = vmatpush2.msra.mxu0 0.0
    %484 = vmatprep.subr.mxu0 0.0
    %485 = vmatpush2.msra.mxu0 0.0
    %486 = vmatprep.subr.mxu0 0.0
    %487 = vmatpush2.msra.mxu0 0.0
    %488 = vmatprep.subr.mxu0 0.0
    %489 = vmatpush2.msra.mxu0 0.0
    %490 = vmatprep.subr.mxu0 0.0
    %491 = vmatpush2.msra.mxu0 0.0
    %492 = vmatprep.subr.mxu0 0.0
    %493 = vmatpush2.msra.mxu0 0.0
    %494 = vmatprep.subr.mxu0 0.0
    %495 = vmatpush2.msra.mxu0 0.0
    %496 = vmatprep.subr.mxu0 0.0
    %497 = vmatpush2.msra.mxu0 0.0
    %498 = vmatprep.subr.mxu0 0.0
    %499 = vmatpush2.msra.mxu0 0.0
    %500 = vmatprep.subr.mxu0 0.0
    %501 = vmatpush2.msra.mxu0 0.0
    %502 = vmatprep.subr.mxu0 0.0
    %503 = vmatpush2.msra.mxu0 0.0
    %504 = vmatprep.subr.mxu0 0.0
    %505 = vmatpush2.msra.mxu0 0.0
    %506 = vmatprep.subr.mxu0 0.0
    %507 = vmatpush2.msra.mxu0 0.0
    %508 = vmatprep.mubr.f32.mxu0 0.0
    %509 = vmatmul.mubr.f32.gmra.mxu0 %v87
    %v510 = vpop.f32.mrf.mxu0
    %v511 = vadd.f32 0.0, %v510
    %v512 = vpop.f32.mrf.mxu0
    %513 = vmatprep.mubr.f32.mxu0 0.0
    %514 = vmatmul.mubr.f32.gmra.mxu0 %v90
    %v515 = vpop.f32.mrf.mxu0
    %v516 = vadd.f32 0.0, %v515
    %v517 = vpop.f32.mrf.mxu0
    %518 = vdwg.mxu0
    %v519 = vlaneseq
    %v520 = vshrl.u32 %v519, 7
    %v521 = vsub.s32 2, %v520
    %v522 = vrot.slane %v84, %v521
    %v524 = vsel %vm171, %v511, 0
    %v527 = vsel %vm171, %v516, 0
    %529 = vmatprep.subr.mxu0 0.0
    %530 = vmatpush1.msra.mxu0 0.0
    %531 = vmatprep.subr.mxu0 0.0
    %532 = vmatpush1.msra.mxu0 0.0
    %533 = vmatprep.subr.mxu0 0.0
    %534 = vmatpush1.msra.mxu0 0.0
    %535 = vmatprep.subr.mxu0 0.0
    %536 = vmatpush1.msra.mxu0 0.0
    %537 = vmatprep.subr.mxu0 0.0
    %538 = vmatpush1.msra.mxu0 0.0
    %539 = vmatprep.subr.mxu0 0.0
    %540 = vmatpush1.msra.mxu0 0.0
    %541 = vmatprep.subr.mxu0 0.0
    %542 = vmatpush1.msra.mxu0 0.0
    %543 = vmatprep.subr.mxu0 0.0
    %544 = vmatpush1.msra.mxu0 0.0
    %545 = vmatprep.subr.mxu0 0.0
    %546 = vmatpush1.msra.mxu0 0.0
    %547 = vmatprep.subr.mxu0 0.0
    %548 = vmatpush1.msra.mxu0 0.0
    %549 = vmatprep.subr.mxu0 0.0
    %550 = vmatpush1.msra.mxu0 0.0
    %551 = vmatprep.subr.mxu0 0.0
    %552 = vmatpush1.msra.mxu0 0.0
    %553 = vmatprep.subr.mxu0 0.0
    %554 = vmatpush1.msra.mxu0 %v443
    %555 = vmatprep.subr.mxu0 0.0
    %556 = vmatpush1.msra.mxu0 %v442
    %557 = vmatprep.subr.mxu0 0.0
    %558 = vmatpush1.msra.mxu0 %v441
    %559 = vmatprep.subr.mxu0 0.0
    %560 = vmatpush1.msra.mxu0 %v440
    %561 = vmatprep.subr.mxu0 0.0
    %562 = vmatpush2.msra.mxu0 0.0
    %563 = vmatprep.subr.mxu0 0.0
    %564 = vmatpush2.msra.mxu0 0.0
    %565 = vmatprep.subr.mxu0 0.0
    %566 = vmatpush2.msra.mxu0 0.0
    %567 = vmatprep.subr.mxu0 0.0
    %568 = vmatpush2.msra.mxu0 0.0
    %569 = vmatprep.subr.mxu0 0.0
    %570 = vmatpush2.msra.mxu0 0.0
    %571 = vmatprep.subr.mxu0 0.0
    %572 = vmatpush2.msra.mxu0 0.0
    %573 = vmatprep.subr.mxu0 0.0
    %574 = vmatpush2.msra.mxu0 0.0
    %575 = vmatprep.subr.mxu0 0.0
    %576 = vmatpush2.msra.mxu0 0.0
    %577 = vmatprep.subr.mxu0 0.0
    %578 = vmatpush2.msra.mxu0 0.0
    %579 = vmatprep.subr.mxu0 0.0
    %580 = vmatpush2.msra.mxu0 0.0
    %581 = vmatprep.subr.mxu0 0.0
    %582 = vmatpush2.msra.mxu0 0.0
    %583 = vmatprep.subr.mxu0 0.0
    %584 = vmatpush2.msra.mxu0 0.0
    %585 = vmatprep.subr.mxu0 0.0
    %586 = vmatpush2.msra.mxu0 0.0
    %587 = vmatprep.subr.mxu0 0.0
    %588 = vmatpush2.msra.mxu0 0.0
    %589 = vmatprep.subr.mxu0 0.0
    %590 = vmatpush2.msra.mxu0 0.0
    %591 = vmatprep.subr.mxu0 0.0
    %592 = vmatpush2.msra.mxu0 0.0
    %593 = vmatprep.mubr.f32.mxu0 0.0
    %594 = vmatmul.mubr.f32.gmra.mxu0 %v524
    %v595 = vpop.f32.mrf.mxu0
    %v596 = vadd.f32 %v522, %v595
    %v597 = vpop.f32.mrf.mxu0
    %598 = vmatprep.mubr.f32.mxu0 0.0
    %599 = vmatmul.mubr.f32.gmra.mxu0 %v527
    %v600 = vpop.f32.mrf.mxu0
    %v601 = vadd.f32 %v522, %v600
    %v602 = vpop.f32.mrf.mxu0
    %603 = vdwg.mxu0
    %v604 = vmul.f32 %v596, %v596
    %v605 = vmul.f32 %v601, %v601
    %606 = vadd.xlane.f32.xlu0 %v604
    %v607 = vpop.xlane.xlu0 %606
    %608 = vadd.xlane.f32.xlu0 %v605
    %v609 = vpop.xlane.xlu0 %608
    %v610 = vmax.f32 %v607, 1e-24
    %v611 = vmax.f32 %v609, 1e-24
    %v612 = vrsqrt.pop %v610
    %v613 = vrsqrt.pop %v611
    %v614 = vmul.f32 %v596, %v612
    %v615 = vmul.f32 %v601, %v613
    %616 = vst [vmem:[#allocation10] sm:$0xff] %v614
    %617 = vst [vmem:[#allocation10 + $0x8] sm:$0xff] %v615
    // Predicated region
    $region38: #{tpu_custom_call.1} parent=1 // pred_check
      _
    $region39: #{tpu_custom_call.1} parent=1 // pred_check_branch
      %619 = sbr.rel (0) target = $region41
    $region40: #{tpu_custom_call.1} parent=1 // pred_region
      %s621 = ssub.s32 256, 256
      %622 = vsyncadd [#allocation4], %s621
      %s623 = sshll.u32 [#allocation10], 4
      %s624 = int_to_ptr.vmem [resolvable:$true] %s623
      %629 = dma.vmem_to_hbm [thread:$0]  %s624, 256, %s5, [#allocation4], 128, 128, 8
    $region41: #{tpu_custom_call.1} parent=1 // pred_fallthru
      _
    // Predicated region
    $region42: #{tpu_custom_call.1} parent=1 // pred_check
      _
    $region43: #{tpu_custom_call.1} parent=1 // pred_check_branch
      %631 = sbr.rel (0) target = $region45
    $region44: #{tpu_custom_call.1} parent=1 // pred_region
      %632 = dma.done [#allocation4], 256
    $region45: #{tpu_custom_call.1} parent=1 // pred_fallthru
      _
    %633 = vsyncpa [#allocation3], 1
    %634 = vsyncpa [#allocation6], 1
    %635 = vsyncpa [#allocation9], 1
    %636 = vsyncpa [#allocation4], 1

</llo_original>
